<compile_context>
chip_gen: v7x
topology: tpu7x:2x2x1
jax: 0.10.0
libtpu: 0.0.40
codegen_flags: <defaults>
</compile_context>

<pallas_src>
import functools

import jax
import jax.numpy as jnp
from jax.experimental import pallas as pl
from jax.experimental.pallas import tpu as pltpu


def _mlp_kernel(x_ref, w1_ref, b1_ref, w2_ref, b2_ref, o_ref):
    # x arrives f32 straight from HBM; cast to bf16 on the VPU here (fused,
    # no extra wrapper-side HBM pass over x).
    x = x_ref[...].astype(jnp.bfloat16)
    # Linear 1: bf16 x bf16 -> f32 accumulate on the MXU.
    h = jnp.dot(x, w1_ref[...], preferred_element_type=jnp.float32)
    h = jnp.maximum(h + b1_ref[...], 0.0)            # bias + ReLU in f32 (VPU)
    # Dropout (eval mode) == identity.
    out = jnp.dot(h.astype(jnp.bfloat16), w2_ref[...],
                  preferred_element_type=jnp.float32)
    o_ref[...] = (out + b2_ref[...]).astype(o_ref.dtype)


def _choose_block_batch(B):
    """Batch tile size.

    - B <= 128: a single block covering the whole batch (block dim == array
      dim satisfies the layout rule; no padding, no masking, one step).
    - larger B: tiles up to 4096 rows (the loop is per-step-overhead-bound,
      not VMEM-bound), at least 2 grid steps and an even step count so the two
      v7x TensorCores stay load-balanced; 16-row aligned for bf16 sublane
      packing.
    """
    B = int(B)
    if B <= 128:
        return B
    steps = max(2, pl.cdiv(B, 4096))
    if steps % 2:
        steps += 1
    return ((pl.cdiv(B, steps) + 15) // 16) * 16


@functools.partial(jax.jit,
                   static_argnames=("out_dtype", "block_batch", "core_parallel"))
def definition_classifier_forward(x, w1, b1, w2, b2, *, out_dtype=jnp.float32,
                                  block_batch=None, core_parallel=False):
    """Fused MLP forward: relu(x @ w1 + b1) @ w2 + b2.

    x  : (B, F) float32
    w1 : (F, H) bfloat16 (preferred) or float32  (transposed PyTorch weight)
    b1 : (H,)   float32
    w2 : (H, T) bfloat16 (preferred) or float32
    b2 : (T,)   float32
    returns (B, T) out_dtype (default float32)
    """
    B, F = x.shape
    H = w1.shape[1]
    T = w2.shape[1]

    bm = _choose_block_batch(B) if block_batch is None else int(block_batch)
    num_steps = pl.cdiv(B, bm)

    # No-op when the caller already stores weights in bf16 (cast once at load).
    w1_bf = w1.astype(jnp.bfloat16)
    w2_bf = w2.astype(jnp.bfloat16)
    b1_2d = b1.reshape(1, H).astype(jnp.float32)
    b2_2d = b2.reshape(1, T).astype(jnp.float32)

    out_itemsize = jnp.dtype(out_dtype).itemsize

    # VMEM footprint: x/out tiles double-buffered by the pipeline; the
    # constant-index weight/bias blocks are never re-fetched after step 0 but
    # keep the default two buffers (~20 KB here), which we account for.
    vmem_needed = (2 * bm * F * 4                                  # x tile (f32)
                   + 2 * (F * H * 2 + H * T * 2 + (H + T) * 4)     # weights/biases
                   + 2 * bm * T * out_itemsize)                    # output tile
    vmem_limit = int(min(vmem_needed + 8 * 1024 * 1024, 64 * 1024 * 1024))

    cost = pl.CostEstimate(
        flops=2 * B * (F * H + H * T),
        transcendentals=0,
        bytes_accessed=int(B * F * 4 + F * H * 2 + H * T * 2
                           + (H + T) * 4 + B * T * out_itemsize),
    )

    # "parallel" is accepted on every TPU generation; CORE_PARALLEL gives real
    # 2-TensorCore sharding of the batch axis on v7x (opt-in via flag).
    batch_sem = pltpu.CORE_PARALLEL if core_parallel else pltpu.PARALLEL

    out = pl.pallas_call(
        _mlp_kernel,
        out_shape=jax.ShapeDtypeStruct((B, T), out_dtype),
        grid_spec=pltpu.PrefetchScalarGridSpec(
            num_scalar_prefetch=0,
            grid=(num_steps,),
            in_specs=[
                pl.BlockSpec((bm, F), lambda i: (i, 0)),   # x tile over batch
                pl.BlockSpec((F, H), lambda i: (0, 0)),    # w1 (full, resident)
                pl.BlockSpec((1, H), lambda i: (0, 0)),    # b1
                pl.BlockSpec((H, T), lambda i: (0, 0)),    # w2 (full, resident)
                pl.BlockSpec((1, T), lambda i: (0, 0)),    # b2
            ],
            out_specs=pl.BlockSpec((bm, T), lambda i: (i, 0)),
        ),
        compiler_params=pltpu.CompilerParams(
            dimension_semantics=(batch_sem,),
            vmem_limit_bytes=vmem_limit),
        cost_estimate=cost,
    )(x, w1_bf, b1_2d, w2_bf, b2_2d)

    return out


def _reference_forward(x, w1, b1, w2, b2):
    # Same mixed-precision math as the kernel (bf16 MXU operands, f32 accum).
    h = jnp.dot(x.astype(jnp.bfloat16), w1.astype(jnp.bfloat16),
                preferred_element_type=jnp.float32) + b1.astype(jnp.float32)
    h = jnp.maximum(h, 0.0)
    return jnp.dot(h.astype(jnp.bfloat16), w2.astype(jnp.bfloat16),
                   preferred_element_type=jnp.float32) + b2.astype(jnp.float32)


if __name__ == "__main__":
    # Shapes consistent with the module: feature_size=32, hidden_size=64,
    # target_size=128, batch=8.
    feature_size, hidden_size, target_size, batch = 32, 64, 128, 8

    key = jax.random.PRNGKey(0)
    kx, kw1, kb1, kw2, kb2, kx2 = jax.random.split(key, 6)

    # Deterministic synthetic parameters; weights cast to bf16 ONCE here
    # ("at load time"), not on every forward call.
    x = jax.random.normal(kx, (batch, feature_size), dtype=jnp.float32)
    w1 = (jax.random.normal(kw1, (feature_size, hidden_size), jnp.float32)
          * 0.1).astype(jnp.bfloat16)
    b1 = jax.random.normal(kb1, (hidden_size,), jnp.float32) * 0.1
    w2 = (jax.random.normal(kw2, (hidden_size, target_size), jnp.float32)
          * 0.1).astype(jnp.bfloat16)
    b2 = jax.random.normal(kb2, (target_size,), jnp.float32) * 0.1

    out = jax.block_until_ready(
        definition_classifier_forward(x, w1, b1, w2, b2))
    ref = _reference_forward(x, w1, b1, w2, b2)
    assert out.shape == (batch, target_size) and out.dtype == jnp.float32
    assert jnp.allclose(out, ref, atol=1e-2, rtol=1e-2), "mismatch vs reference"

    # Multi-step ragged batch: 2 balanced grid steps, masked partial last
    # block, no jnp.pad copy of x.
    big_batch = 300
    x_big = jax.random.normal(kx2, (big_batch, feature_size), jnp.float32)
    out_big = jax.block_until_ready(
        definition_classifier_forward(x_big, w1, b1, w2, b2))
    ref_big = _reference_forward(x_big, w1, b1, w2, b2)
    assert out_big.shape == (big_batch, target_size)
    assert jnp.allclose(out_big, ref_big, atol=1e-2, rtol=1e-2), \
        "mismatch vs reference (large batch)"

    print("KERNEL_OK")
</pallas_src>

<mosaic_0001>
module attributes {stable_mosaic.version = 11 : i64} {
  func.func @_mlp_kernel(%arg0: i32, %arg1: memref<8x32xf32, #tpu.memory_space<vmem>>, %arg2: memref<32x64xbf16, #tpu.memory_space<vmem>>, %arg3: memref<1x64xf32, #tpu.memory_space<vmem>>, %arg4: memref<64x128xbf16, #tpu.memory_space<vmem>>, %arg5: memref<1x128xf32, #tpu.memory_space<vmem>>, %arg6: memref<8x128xf32, #tpu.memory_space<vmem>>) attributes {dimension_semantics = [#tpu.dimension_semantics<parallel>], iteration_bounds = array<i64: 1>, scalar_prefetch = 0 : i64, scratch_operands = 0 : i64, tpu.core_type = #tpu.core_type<tc>, window_params = [{transform_indices = @transform_0, window_bounds = array<i64: 8, 32>}, {pipeline_mode = #tpu.pipeline_mode<synchronous>, transform_indices = @transform_1, window_bounds = array<i64: 32, 64>}, {pipeline_mode = #tpu.pipeline_mode<synchronous>, transform_indices = @transform_2, window_bounds = array<i64: 1, 64>}, {pipeline_mode = #tpu.pipeline_mode<synchronous>, transform_indices = @transform_3, window_bounds = array<i64: 64, 128>}, {pipeline_mode = #tpu.pipeline_mode<synchronous>, transform_indices = @transform_4, window_bounds = array<i64: 1, 128>}, {transform_indices = @transform_5, window_bounds = array<i64: 8, 128>}]} {
    %c0 = arith.constant 0 : index
    %c0_0 = arith.constant 0 : index
    %0 = vector.load %arg1[%c0, %c0_0] : memref<8x32xf32, #tpu.memory_space<vmem>>, vector<8x32xf32>
    %1 = arith.truncf %0 : vector<8x32xf32> to vector<8x32xbf16>
    %c0_1 = arith.constant 0 : index
    %c0_2 = arith.constant 0 : index
    %2 = vector.load %arg2[%c0_1, %c0_2] : memref<32x64xbf16, #tpu.memory_space<vmem>>, vector<32x64xbf16>
    %cst = arith.constant dense<0.000000e+00> : vector<8x64xf32>
    %3 = tpu.matmul %1, %2, %cst {dimension_numbers = #tpu.dot_dimension_numbers<[1], [0], [0], [1], [0, 0, 1, 1], [], []>} : vector<8x32xbf16>, vector<32x64xbf16>, vector<8x64xf32> -> vector<8x64xf32>
    %c0_3 = arith.constant 0 : index
    %c0_4 = arith.constant 0 : index
    %4 = vector.load %arg3[%c0_3, %c0_4] : memref<1x64xf32, #tpu.memory_space<vmem>>, vector<1x64xf32>
    %5 = vector.broadcast %4 : vector<1x64xf32> to vector<8x64xf32>
    %6 = arith.addf %3, %5 : vector<8x64xf32>
    %cst_5 = arith.constant 0.000000e+00 : f32
    %7 = vector.broadcast %cst_5 : f32 to vector<8x64xf32>
    %8 = arith.maximumf %6, %7 : vector<8x64xf32>
    %9 = arith.truncf %8 : vector<8x64xf32> to vector<8x64xbf16>
    %c0_6 = arith.constant 0 : index
    %c0_7 = arith.constant 0 : index
    %10 = vector.load %arg4[%c0_6, %c0_7] : memref<64x128xbf16, #tpu.memory_space<vmem>>, vector<64x128xbf16>
    %cst_8 = arith.constant dense<0.000000e+00> : vector<8x128xf32>
    %11 = tpu.matmul %9, %10, %cst_8 {dimension_numbers = #tpu.dot_dimension_numbers<[1], [0], [0], [1], [0, 0, 1, 1], [], []>} : vector<8x64xbf16>, vector<64x128xbf16>, vector<8x128xf32> -> vector<8x128xf32>
    %c0_9 = arith.constant 0 : index
    %c0_10 = arith.constant 0 : index
    %12 = vector.load %arg5[%c0_9, %c0_10] : memref<1x128xf32, #tpu.memory_space<vmem>>, vector<1x128xf32>
    %13 = vector.broadcast %12 : vector<1x128xf32> to vector<8x128xf32>
    %14 = arith.addf %11, %13 : vector<8x128xf32>
    %c0_11 = arith.constant 0 : index
    %c0_12 = arith.constant 0 : index
    %15 = vector.load %arg6[%c0_11, %c0_12] : memref<8x128xf32, #tpu.memory_space<vmem>>, vector<8x128xf32>
    tpu.vector_store %arg6[%c0_11, %c0_12], %14 {strides = array<i32>} : memref<8x128xf32, #tpu.memory_space<vmem>>, vector<8x128xf32>,
    return
  }
  func.func @transform_0(%arg0: i32) -> (i32, i32) {
    %c0_i32 = arith.constant 0 : i32
    %c0_i32_0 = arith.constant 0 : i32
    return %arg0, %c0_i32 : i32, i32
  }
  func.func @transform_1(%arg0: i32) -> (i32, i32) {
    %c0_i32 = arith.constant 0 : i32
    %c0_i32_0 = arith.constant 0 : i32
    %c0_i32_1 = arith.constant 0 : i32
    return %c0_i32, %c0_i32_0 : i32, i32
  }
  func.func @transform_2(%arg0: i32) -> (i32, i32) {
    %c0_i32 = arith.constant 0 : i32
    %c0_i32_0 = arith.constant 0 : i32
    %c0_i32_1 = arith.constant 0 : i32
    return %c0_i32, %c0_i32_0 : i32, i32
  }
  func.func @transform_3(%arg0: i32) -> (i32, i32) {
    %c0_i32 = arith.constant 0 : i32
    %c0_i32_0 = arith.constant 0 : i32
    %c0_i32_1 = arith.constant 0 : i32
    return %c0_i32, %c0_i32_0 : i32, i32
  }
  func.func @transform_4(%arg0: i32) -> (i32, i32) {
    %c0_i32 = arith.constant 0 : i32
    %c0_i32_0 = arith.constant 0 : i32
    %c0_i32_1 = arith.constant 0 : i32
    return %c0_i32, %c0_i32_0 : i32, i32
  }
  func.func @transform_5(%arg0: i32) -> (i32, i32) {
    %c0_i32 = arith.constant 0 : i32
    %c0_i32_0 = arith.constant 0 : i32
    return %arg0, %c0_i32 : i32, i32
  }
}

</mosaic_0001>

<llo_original>
// kernel: definition_classifier_forward.1
$region0: #{definition_classifier_forward.1}
  #allocation0 [shape = 'u32[]', space=smem, size = 0x4, offset = 0x4, fixed_abs, tag = 'smem constant byte address 0x4 - core index']
  #allocation1 [shape = 'u32[144,128]{1,0:T(1,128)}', space=vmem, size = 0x12000, scoped, tag = 'internal scratch']
  %s0 = inlined_call_operand.hbm [shape: f32[8,32], index: 0, kind: input, shape index: {}]
  %s1 = inlined_call_operand.hbm [shape: bf16[32,64], index: 1, kind: input, shape index: {}]
  %s2 = inlined_call_operand.vmem [shape: f32[1,64], index: 2, kind: input, shape index: {}]
  %s3 = inlined_call_operand.hbm [shape: bf16[64,128], index: 3, kind: input, shape index: {}]
  %s4 = inlined_call_operand.vmem [shape: f32[1,128], index: 4, kind: input, shape index: {}]
  %s5 = inlined_call_operand.hbm [shape: f32[8,128], index: 5, kind: output, shape index: {}]
  %s6 = sld [smem:[#allocation0]]
  $region42: #{definition_classifier_forward.1} parent=0
    _
  %s8 = ssub.s32 1, %s6
  %s9 = scalar_select 0, %s8, %s6
  $region1: #{definition_classifier_forward.1} parent=0
    #allocation2 [shape = 'u8[4096]{0}', space=vmem, size = 0x1000, scoped, tag = 'input window, operand 0, single buffered']
    #allocation3 [shape = 's32[1]{0}', space=sflag, size = 0x4, scoped, tag = 'scoped memory for definition_classifier_forward.1']
    #allocation4 [shape = 's32[1]{0}', space=sflag, size = 0x4, scoped, tag = 'scoped memory for definition_classifier_forward.1']
    #allocation5 [shape = 'u8[8192]{0}', space=vmem, size = 0x2000, scoped, tag = 'input window, operand 1, single buffered']
    #allocation6 [shape = 's32[1]{0}', space=sflag, size = 0x4, scoped, tag = 'scoped memory for definition_classifier_forward.1']
    #allocation7 [shape = 'u8[16384]{0}', space=vmem, size = 0x4000, scoped, tag = 'input window, operand 3, single buffered']
    #allocation8 [shape = 'u8[4096]{0}', space=vmem, size = 0x1000, scoped, tag = 'output window, operand 0, single buffered']
    %10 = vsyncpa [#allocation3], 0
    %11 = vsyncpa [#allocation6], 0
    %12 = vsyncpa [#allocation4], 0
    // Predicated region
    $region2: #{definition_classifier_forward.1} parent=1 // pred_check
      _
    $region3: #{definition_classifier_forward.1} parent=1 // pred_check_branch
      %14 = sbr.rel (0) target = $region5
    $region4: #{definition_classifier_forward.1} parent=1 // pred_region
      %s16 = ssub.s32 128, 128
      %17 = vsyncadd [#allocation3], %s16
      %s19 = sshll.u32 [#allocation2], 4
      %s20 = int_to_ptr.vmem [resolvable:$true] %s19
      %22 = dma.hbm_to_vmem [thread:$0]  %s0, 128, %s20, [#allocation3]
    $region5: #{definition_classifier_forward.1} parent=1 // pred_fallthru
      _
    // Predicated region
    $region6: #{definition_classifier_forward.1} parent=1 // pred_check
      _
    $region7: #{definition_classifier_forward.1} parent=1 // pred_check_branch
      %24 = sbr.rel (0) target = $region9
    $region8: #{definition_classifier_forward.1} parent=1 // pred_region
      %s26 = ssub.s32 256, 256
      %27 = vsyncadd [#allocation6], %s26
      %s28 = sshll.u32 [#allocation5], 4
      %s29 = int_to_ptr.vmem [resolvable:$true] %s28
      %34 = dma.hbm_to_vmem [thread:$0]  %s1, 256, %s29, [#allocation6], 64, 64, 4
    $region9: #{definition_classifier_forward.1} parent=1 // pred_fallthru
      _
    // Predicated region
    $region10: #{definition_classifier_forward.1} parent=1 // pred_check
      _
    $region11: #{definition_classifier_forward.1} parent=1 // pred_check_branch
      %36 = sbr.rel (0) target = $region13
    $region12: #{definition_classifier_forward.1} parent=1 // pred_region
      _
    $region13: #{definition_classifier_forward.1} parent=1 // pred_fallthru
      _
    // Predicated region
    $region14: #{definition_classifier_forward.1} parent=1 // pred_check
      _
    $region15: #{definition_classifier_forward.1} parent=1 // pred_check_branch
      %38 = sbr.rel (0) target = $region17
    $region16: #{definition_classifier_forward.1} parent=1 // pred_region
      %s40 = ssub.s32 512, 512
      %41 = vsyncadd [#allocation6], %s40
      %s42 = sshll.u32 [#allocation7], 4
      %s43 = int_to_ptr.vmem [resolvable:$true] %s42
      %48 = dma.hbm_to_vmem [thread:$0]  %s3, 512, %s43, [#allocation6], 64, 64, 4
    $region17: #{definition_classifier_forward.1} parent=1 // pred_fallthru
      _
    // Predicated region
    $region18: #{definition_classifier_forward.1} parent=1 // pred_check
      _
    $region19: #{definition_classifier_forward.1} parent=1 // pred_check_branch
      %50 = sbr.rel (0) target = $region21
    $region20: #{definition_classifier_forward.1} parent=1 // pred_region
      _
    $region21: #{definition_classifier_forward.1} parent=1 // pred_fallthru
      _
    // Predicated region
    $region22: #{definition_classifier_forward.1} parent=1 // pred_check
      _
    $region23: #{definition_classifier_forward.1} parent=1 // pred_check_branch
      %52 = sbr.rel (0) target = $region25
    $region24: #{definition_classifier_forward.1} parent=1 // pred_region
      %53 = dma.done [#allocation3], 128
    $region25: #{definition_classifier_forward.1} parent=1 // pred_fallthru
      _
    // Predicated region
    $region26: #{definition_classifier_forward.1} parent=1 // pred_check
      _
    $region27: #{definition_classifier_forward.1} parent=1 // pred_check_branch
      %55 = sbr.rel (0) target = $region29
    $region28: #{definition_classifier_forward.1} parent=1 // pred_region
      %56 = dma.done [#allocation6], 256
    $region29: #{definition_classifier_forward.1} parent=1 // pred_fallthru
      _
    // Predicated region
    $region30: #{definition_classifier_forward.1} parent=1 // pred_check
      _
    $region31: #{definition_classifier_forward.1} parent=1 // pred_check_branch
      %58 = sbr.rel (0) target = $region33
    $region32: #{definition_classifier_forward.1} parent=1 // pred_region
      %59 = dma.done [#allocation6], 512
    $region33: #{definition_classifier_forward.1} parent=1 // pred_fallthru
      _
    %v61 = vld [vmem:[#allocation2] sm:$0xff]
    %v62 = vpack.c.bf16 %v61, %v61
    %v63 = vld [vmem:[#allocation5] sm:$0xf]
    %v64 = vld [vmem:[#allocation5 + $0x4] sm:$0xf]
    %v65 = vld [vmem:[#allocation5 + $0x8] sm:$0xf]
    %v66 = vld [vmem:[#allocation5 + $0xc] sm:$0xf]
    %v67 = vld [vmem:[%s2] sm:$0x1]
    %v69 = vlaneseq
    %v70 = vshrl.u32 %v69, 7
    %v71 = vsub.s32 0, %v70
    %v72 = vrot.slane %v67, %v71
    %v78 = vunpack.c.l.b16 %v63
    %v79 = vunpack.c.l.b16 %v64
    %v80 = vunpack.c.l.b16 %v65
    %v81 = vunpack.c.l.b16 %v66
    %v82 = vpack.c.b16 %v79, %v78
    %v83 = vpack.c.b16 %v81, %v80
    %vm86 = vcmask 261120
    %v88 = vsel %vm86, %v62, 0
    %90 = vmatprep.subr.bf16.mxu0 0
    %91 = vmatpush1.bf16.msra.mxu0 %v82
    %92 = vmatprep.subr.bf16.mxu0 0
    %93 = vmatpush1.bf16.msra.mxu0 %v83
    %94 = vmatprep.subr.bf16.mxu0 0
    %95 = vmatpush1.bf16.msra.mxu0 0
    %96 = vmatprep.subr.bf16.mxu0 0
    %97 = vmatpush1.bf16.msra.mxu0 0
    %98 = vmatprep.subr.bf16.mxu0 0
    %99 = vmatpush1.bf16.msra.mxu0 0
    %100 = vmatprep.subr.bf16.mxu0 0
    %101 = vmatpush1.bf16.msra.mxu0 0
    %102 = vmatprep.subr.bf16.mxu0 0
    %103 = vmatpush1.bf16.msra.mxu0 0
    %104 = vmatprep.subr.bf16.mxu0 0
    %105 = vmatpush1.bf16.msra.mxu0 0
    %106 = vmatprep.subr.bf16.mxu0 0
    %107 = vmatpush1.bf16.msra.mxu0 0
    %108 = vmatprep.subr.bf16.mxu0 0
    %109 = vmatpush1.bf16.msra.mxu0 0
    %110 = vmatprep.subr.bf16.mxu0 0
    %111 = vmatpush1.bf16.msra.mxu0 0
    %112 = vmatprep.subr.bf16.mxu0 0
    %113 = vmatpush1.bf16.msra.mxu0 0
    %114 = vmatprep.subr.bf16.mxu0 0
    %115 = vmatpush1.bf16.msra.mxu0 0
    %116 = vmatprep.subr.bf16.mxu0 0
    %117 = vmatpush1.bf16.msra.mxu0 0
    %118 = vmatprep.subr.bf16.mxu0 0
    %119 = vmatpush1.bf16.msra.mxu0 0
    %120 = vmatprep.subr.bf16.mxu0 0
    %121 = vmatpush1.bf16.msra.mxu0 0
    %122 = vmatprep.mubr.bf16.mxu0 0
    %123 = vmatmul.mubr.bf16.gmra.mrb[0].mxu0 %v88
    %v124 = vpop.f32.mrb[0].mxu0
    %v125 = vadd.f32 %v72, %v124
    %v126 = vpop.f32.mrb[0].mxu0
    %v127 = vpop.f32.mrb[0].mxu0
    %v128 = vpop.f32.mrb[0].mxu0
    %129 = vdwg.mxu0
    %v130 = vmax.f32 %v125, 0.0
    %v131 = vpack.c.bf16 %v130, %v130
    %v132 = vld [vmem:[#allocation7] sm:$0xf]
    %v133 = vld [vmem:[#allocation7 + $0x4] sm:$0xf]
    %v134 = vld [vmem:[#allocation7 + $0x8] sm:$0xf]
    %v135 = vld [vmem:[#allocation7 + $0xc] sm:$0xf]
    %v136 = vld [vmem:[#allocation7 + $0x10] sm:$0xf]
    %v137 = vld [vmem:[#allocation7 + $0x14] sm:$0xf]
    %v138 = vld [vmem:[#allocation7 + $0x18] sm:$0xf]
    %v139 = vld [vmem:[#allocation7 + $0x1c] sm:$0xf]
    %v140 = vld [vmem:[%s4] sm:$0x1]
    %v142 = vlaneseq
    %v143 = vshrl.u32 %v142, 7
    %v144 = vsub.s32 0, %v143
    %v145 = vrot.slane %v140, %v144
    %v155 = vunpack.c.l.b16 %v132
    %v156 = vunpack.c.l.b16 %v133
    %v157 = vunpack.c.l.b16 %v134
    %v158 = vunpack.c.l.b16 %v135
    %v159 = vunpack.c.l.b16 %v136
    %v160 = vunpack.c.l.b16 %v137
    %v161 = vunpack.c.l.b16 %v138
    %v162 = vunpack.c.l.b16 %v139
    %v163 = vpack.c.b16 %v156, %v155
    %v164 = vpack.c.b16 %v158, %v157
    %v165 = vpack.c.b16 %v160, %v159
    %v166 = vpack.c.b16 %v162, %v161
    %vm171 = vcmask 523264
    %v173 = vsel %vm171, %v131, 0
    %175 = vmatprep.subr.bf16.mxu0 0
    %176 = vmatpush1.bf16.msra.mxu0 %v163
    %177 = vmatprep.subr.bf16.mxu0 0
    %178 = vmatpush1.bf16.msra.mxu0 %v164
    %179 = vmatprep.subr.bf16.mxu0 0
    %180 = vmatpush1.bf16.msra.mxu0 %v165
    %181 = vmatprep.subr.bf16.mxu0 0
    %182 = vmatpush1.bf16.msra.mxu0 %v166
    %183 = vmatprep.subr.bf16.mxu0 0
    %184 = vmatpush1.bf16.msra.mxu0 0
    %185 = vmatprep.subr.bf16.mxu0 0
    %186 = vmatpush1.bf16.msra.mxu0 0
    %187 = vmatprep.subr.bf16.mxu0 0
    %188 = vmatpush1.bf16.msra.mxu0 0
    %189 = vmatprep.subr.bf16.mxu0 0
    %190 = vmatpush1.bf16.msra.mxu0 0
    %191 = vmatprep.subr.bf16.mxu0 0
    %192 = vmatpush1.bf16.msra.mxu0 0
    %193 = vmatprep.subr.bf16.mxu0 0
    %194 = vmatpush1.bf16.msra.mxu0 0
    %195 = vmatprep.subr.bf16.mxu0 0
    %196 = vmatpush1.bf16.msra.mxu0 0
    %197 = vmatprep.subr.bf16.mxu0 0
    %198 = vmatpush1.bf16.msra.mxu0 0
    %199 = vmatprep.subr.bf16.mxu0 0
    %200 = vmatpush1.bf16.msra.mxu0 0
    %201 = vmatprep.subr.bf16.mxu0 0
    %202 = vmatpush1.bf16.msra.mxu0 0
    %203 = vmatprep.subr.bf16.mxu0 0
    %204 = vmatpush1.bf16.msra.mxu0 0
    %205 = vmatprep.subr.bf16.mxu0 0
    %206 = vmatpush1.bf16.msra.mxu0 0
    %207 = vmatprep.mubr.bf16.mxu0 0
    %208 = vmatmul.mubr.bf16.gmra.mrb[0].mxu0 %v173
    %v209 = vpop.f32.mrb[0].mxu0
    %v210 = vadd.f32 %v145, %v209
    %v211 = vpop.f32.mrb[0].mxu0
    %v212 = vpop.f32.mrb[0].mxu0
    %v213 = vpop.f32.mrb[0].mxu0
    %214 = vdwg.mxu0
    %215 = vst [vmem:[#allocation8] sm:$0xff] %v210
    // Predicated region
    $region34: #{definition_classifier_forward.1} parent=1 // pred_check
      _
    $region35: #{definition_classifier_forward.1} parent=1 // pred_check_branch
      %217 = sbr.rel (0) target = $region37
    $region36: #{definition_classifier_forward.1} parent=1 // pred_region
      %s219 = ssub.s32 128, 128
      %220 = vsyncadd [#allocation4], %s219
      %s222 = sshll.u32 [#allocation8], 4
      %s223 = int_to_ptr.vmem [resolvable:$true] %s222
      %225 = dma.vmem_to_hbm [thread:$0]  %s223, 128, %s5, [#allocation4]
    $region37: #{definition_classifier_forward.1} parent=1 // pred_fallthru
      _
    // Predicated region
    $region38: #{definition_classifier_forward.1} parent=1 // pred_check
      _
    $region39: #{definition_classifier_forward.1} parent=1 // pred_check_branch
      %227 = sbr.rel (0) target = $region41
    $region40: #{definition_classifier_forward.1} parent=1 // pred_region
      %228 = dma.done [#allocation4], 128
    $region41: #{definition_classifier_forward.1} parent=1 // pred_fallthru
      _
    %229 = vsyncpa [#allocation3], 1
    %230 = vsyncpa [#allocation6], 1
    %231 = vsyncpa [#allocation4], 1

</llo_original>
